<compile_context>
chip_gen: v7x
topology: tpu7x:2x2x1
jax: 0.10.0
libtpu: 0.0.40
codegen_flags: <defaults>
</compile_context>

<pallas_src>
import functools

import jax
import jax.numpy as jnp
from jax import lax
from jax.experimental import pallas as pl
from jax.experimental.pallas import tpu as pltpu


def _bce_partial_kernel(x_ref, t_ref, o_ref, *, tr, width, acc_rows,
                        num_tiles, tiles_per_split, has_overshoot, tail):
    """Accumulate un-weighted BCE partial sums for one (tr, width) row tile.

    o_ref is the resident (acc_rows, width) f32 output block of this split and
    is used directly as the accumulator (zeroed at the first tile of the split).
    Per-class weight / negation / 1/N are applied later on this tiny array.
    """
    p = pl.program_id(0)            # split axis ("parallel", <= 2 TensorCores)
    i = pl.program_id(1)            # row-tile axis within the split ("arbitrary")
    logical = p * tiles_per_split + i

    @pl.when(i == 0)
    def _():
        o_ref[...] = jnp.zeros_like(o_ref)

    def accumulate(mask_rows):
        x = x_ref[...].astype(jnp.float32)      # (tr, width) probabilities
        t = t_ref[...].astype(jnp.float32)      # (tr, width) targets in [0, 1]
        # Clamp the logs at -100 BEFORE combining with t (PyTorch semantics,
        # also avoids inf*0 -> nan); log1p(-x) for accuracy near x=1.
        log_x = jnp.maximum(jnp.log(x), -100.0)
        log_1mx = jnp.maximum(jnp.log1p(-x), -100.0)
        term = log_1mx + t * (log_x - log_1mx)  # == t*log(x) + (1-t)*log(1-x)
        if mask_rows:
            # Only the (single) partially-valid last tile pays for masking.
            row = lax.broadcasted_iota(jnp.int32, (tr, 1), 0)
            term = jnp.where(row < tail, term, 0.0)
        if tr == acc_rows:
            o_ref[...] += term
        else:
            o_ref[...] += term.reshape(tr // acc_rows, acc_rows, width).sum(axis=0)

    if tail == 0:
        if has_overshoot:
            # Odd tile count split over 2 cores: skip the clamped overshoot tile.
            @pl.when(logical < num_tiles)
            def _():
                accumulate(False)
        else:
            accumulate(False)
    else:
        if num_tiles > 1:
            @pl.when(logical < num_tiles - 1)
            def _():
                accumulate(False)

        @pl.when(logical == num_tiles - 1)
        def _():
            accumulate(True)


def _round_down(v, m):
    return (v // m) * m


def _choose_row_tile(n_rows, width, itemsize, block_bytes):
    """Pick a row tile giving ~block_bytes per streamed input block."""
    per_row = max(1, width * itemsize)
    # Multiple of 32 rows (covers f32/bf16/int8 sublane packing).
    tr = max(32, _round_down(block_bytes // per_row, 32))
    if tr >= n_rows:
        return n_rows          # single full-extent tile (legal: equals array dim)
    return tr


def cls_sigmoid_loss(inp, target, cls_weights, *, block_bytes=1 << 20):
    """Pallas equivalent of CLSSigmoid.forward(input, target)."""
    n, c = inp.shape
    assert target.shape == (n, c)
    if n == 0 or c == 0:
        return jnp.float32(0.0)

    # Static (shape-derived), matching max(1.0, float(N)) in the torch module.
    inv_normalizer = 1.0 / max(1.0, float(n))
    w_f32 = jnp.asarray(cls_weights, jnp.float32).reshape(c)

    itemsize = max(jnp.dtype(inp.dtype).itemsize, jnp.dtype(target.dtype).itemsize)

    if 128 % c == 0 and (n * c) % 128 == 0:
        # Lane-dense fast path: free reshape (N, C) -> (rows, 128). Since C | 128,
        # the class of a flattened element depends only on its lane, so the
        # weights become a single (128,) lane pattern applied in the wrapper.
        width = 128
        rows = (n * c) // 128
        x2 = inp.reshape(rows, width)
        t2 = target.reshape(rows, width)
        lane_w = jnp.tile(w_f32, width // c)
    else:
        # Fallback: natural (N, C) layout, class axis as the full-extent last
        # block dim -> HBM traffic stays exactly N*C elements (no padding copy).
        # TODO(synk): for small C not dividing 128, a lane-dense layout with a
        # periodic (lcm(C,128)/128, 128) resident weight tile would keep full
        # lane occupancy; not needed while the kernel stays HBM-bound.
        width = c
        rows = n
        x2 = inp
        t2 = target
        lane_w = w_f32

    tr = _choose_row_tile(rows, width, itemsize, block_bytes)
    num_tiles = pl.cdiv(rows, tr)
    tail = rows % tr                      # valid rows in the last tile (0 = full)

    # Leading "parallel" axis: up to 2 TensorCores (v7x); sequential elsewhere.
    split = 2 if num_tiles >= 2 else 1
    tiles_per_split = pl.cdiv(num_tiles, split)
    has_overshoot = split * tiles_per_split != num_tiles

    acc_rows = 8 if tr % 8 == 0 else tr   # vreg-sized accumulator when possible

    if has_overshoot:
        def in_idx(p, i):
            # Clamp so the DMA for the overshoot tile stays in bounds; the
            # kernel skips its contribution via the `logical < num_tiles` gate.
            return (jnp.minimum(p * tiles_per_split + i, num_tiles - 1), 0)
    else:
        def in_idx(p, i):
            return (p * tiles_per_split + i, 0)

    kernel = functools.partial(
        _bce_partial_kernel, tr=tr, width=width, acc_rows=acc_rows,
        num_tiles=num_tiles, tiles_per_split=tiles_per_split,
        has_overshoot=has_overshoot, tail=tail)

    partials = pl.pallas_call(
        kernel,
        out_shape=jax.ShapeDtypeStruct((split * acc_rows, width), jnp.float32),
        grid=(split, tiles_per_split),
        in_specs=[
            pl.BlockSpec((tr, width), in_idx),    # probabilities (pipelined)
            pl.BlockSpec((tr, width), in_idx),    # targets (pipelined)
        ],
        out_specs=pl.BlockSpec((acc_rows, width), lambda p, i: (p, 0)),
        compiler_params=pltpu.CompilerParams(
            dimension_semantics=("parallel", "arbitrary"),
            vmem_limit_bytes=32 * 1024 * 1024,
        ),
    )(x2, t2)

    # Finalize once on the tiny (split*acc_rows, width) partial-sum array:
    # per-class weight, negation and 1/N normalizer.
    return (-inv_normalizer) * jnp.sum(partials * lane_w[None, :])


def _reference_loss(x, t, w, n):
    """Pure-JAX reference matching F.binary_cross_entropy(..., reduction='sum')/N."""
    log_x = jnp.maximum(jnp.log(x), -100.0)
    log_1mx = jnp.maximum(jnp.log(1.0 - x), -100.0)
    per = -w[None, :] * (t * log_x + (1.0 - t) * log_1mx)
    return jnp.sum(per) / max(1.0, float(n))


if __name__ == "__main__":
    # Primary small example consistent with the module: batch=8, classes=4.
    N, C = 8, 4
    k1, k2 = jax.random.split(jax.random.PRNGKey(0))
    x = jax.nn.sigmoid(jax.random.normal(k1, (N, C), dtype=jnp.float32))
    t = (jax.random.uniform(k2, (N, C)) > 0.5).astype(jnp.float32)
    cls_weights = jnp.linspace(0.5, 2.0, C, dtype=jnp.float32)

    loss = cls_sigmoid_loss(x, t, cls_weights)
    jax.block_until_ready(loss)
    ref = _reference_loss(x, t, cls_weights, N)
    assert jnp.allclose(loss, ref, rtol=1e-5, atol=1e-5), (loss, ref)

    # Extra small checks exercising the other code paths:
    #   (1320,16): lane-dense, multi-tile, 2-way split with overshoot + masked tail
    #   (100, 10): non-divisor-C fallback, multi-tile, 2-way split + masked tail
    #   (320, 16): lane-dense, single full-extent tile with (8,width) accumulator
    for (n2, c2, bb) in [(1320, 16, 64 * 512), (100, 10, 32 * 40), (320, 16, 1 << 20)]:
        ka, kb = jax.random.split(jax.random.PRNGKey(n2 + c2))
        x2 = jax.nn.sigmoid(jax.random.normal(ka, (n2, c2), dtype=jnp.float32))
        t2 = (jax.random.uniform(kb, (n2, c2)) > 0.5).astype(jnp.float32)
        w2 = jnp.linspace(0.25, 1.75, c2, dtype=jnp.float32)
        got = cls_sigmoid_loss(x2, t2, w2, block_bytes=bb)
        jax.block_until_ready(got)
        want = _reference_loss(x2, t2, w2, n2)
        assert jnp.allclose(got, want, rtol=1e-4, atol=1e-4), (n2, c2, got, want)

    print("KERNEL_OK")
</pallas_src>

<mosaic_0001>
module attributes {stable_mosaic.version = 11 : i64} {
  func.func @_bce_partial_kernel(%arg0: i32, %arg1: i32, %arg2: memref<8x4xf32, #tpu.memory_space<vmem>>, %arg3: memref<8x4xf32, #tpu.memory_space<vmem>>, %arg4: memref<8x4xf32, #tpu.memory_space<vmem>>) attributes {dimension_semantics = [#tpu.dimension_semantics<parallel>, #tpu.dimension_semantics<arbitrary>], iteration_bounds = array<i64: 1, 1>, scalar_prefetch = 0 : i64, scratch_operands = 0 : i64, tpu.core_type = #tpu.core_type<tc>, window_params = [{transform_indices = @transform_0, window_bounds = array<i64: 8, 4>}, {transform_indices = @transform_1, window_bounds = array<i64: 8, 4>}, {transform_indices = @transform_2, window_bounds = array<i64: 8, 4>}]} {
    %c0_i32 = arith.constant 0 : i32
    %0 = arith.cmpi eq, %arg1, %c0_i32 : i32
    %1 = arith.extui %0 : i1 to i32
    %c0_i32_0 = arith.constant 0 : i32
    %2 = arith.cmpi ne, %1, %c0_i32_0 : i32
    scf.if %2 {
      %cst_10 = arith.constant 0.000000e+00 : f32
      %19 = vector.broadcast %cst_10 : f32 to vector<8x4xf32>
      %c0_11 = arith.constant 0 : index
      %c0_12 = arith.constant 0 : index
      %20 = vector.load %arg4[%c0_11, %c0_12] : memref<8x4xf32, #tpu.memory_space<vmem>>, vector<8x4xf32>
      tpu.vector_store %arg4[%c0_11, %c0_12], %19 {strides = array<i32>} : memref<8x4xf32, #tpu.memory_space<vmem>>, vector<8x4xf32>,
    } else {
    }
    %c0 = arith.constant 0 : index
    %c0_1 = arith.constant 0 : index
    %3 = vector.load %arg2[%c0, %c0_1] : memref<8x4xf32, #tpu.memory_space<vmem>>, vector<8x4xf32>
    %c0_2 = arith.constant 0 : index
    %c0_3 = arith.constant 0 : index
    %4 = vector.load %arg3[%c0_2, %c0_3] : memref<8x4xf32, #tpu.memory_space<vmem>>, vector<8x4xf32>
    %5 = math.log %3 : vector<8x4xf32>
    %cst = arith.constant -1.000000e+02 : f32
    %6 = vector.broadcast %cst : f32 to vector<8x4xf32>
    %7 = arith.maximumf %5, %6 : vector<8x4xf32>
    %cst_4 = arith.constant 0.000000e+00 : f32
    %8 = vector.broadcast %cst_4 : f32 to vector<8x4xf32>
    %9 = arith.subf %8, %3 : vector<8x4xf32>
    %10 = math.log1p %9 : vector<8x4xf32>
    %cst_5 = arith.constant -1.000000e+02 : f32
    %11 = vector.broadcast %cst_5 : f32 to vector<8x4xf32>
    %12 = arith.maximumf %10, %11 : vector<8x4xf32>
    %13 = arith.subf %7, %12 : vector<8x4xf32>
    %14 = arith.mulf %4, %13 : vector<8x4xf32>
    %15 = arith.addf %12, %14 : vector<8x4xf32>
    %c0_6 = arith.constant 0 : index
    %c0_7 = arith.constant 0 : index
    %16 = vector.load %arg4[%c0_6, %c0_7] : memref<8x4xf32, #tpu.memory_space<vmem>>, vector<8x4xf32>
    %17 = arith.addf %16, %15 : vector<8x4xf32>
    %c0_8 = arith.constant 0 : index
    %c0_9 = arith.constant 0 : index
    %18 = vector.load %arg4[%c0_8, %c0_9] : memref<8x4xf32, #tpu.memory_space<vmem>>, vector<8x4xf32>
    tpu.vector_store %arg4[%c0_8, %c0_9], %17 {strides = array<i32>} : memref<8x4xf32, #tpu.memory_space<vmem>>, vector<8x4xf32>,
    return
  }
  func.func @transform_0(%arg0: i32, %arg1: i32) -> (i32, i32) {
    %c1_i32 = arith.constant 1 : i32
    %0 = arith.muli %arg0, %c1_i32 : i32
    %1 = arith.addi %0, %arg1 : i32
    %c0_i32 = arith.constant 0 : i32
    %c0_i32_0 = arith.constant 0 : i32
    return %1, %c0_i32 : i32, i32
  }
  func.func @transform_1(%arg0: i32, %arg1: i32) -> (i32, i32) {
    %c1_i32 = arith.constant 1 : i32
    %0 = arith.muli %arg0, %c1_i32 : i32
    %1 = arith.addi %0, %arg1 : i32
    %c0_i32 = arith.constant 0 : i32
    %c0_i32_0 = arith.constant 0 : i32
    return %1, %c0_i32 : i32, i32
  }
  func.func @transform_2(%arg0: i32, %arg1: i32) -> (i32, i32) {
    %c0_i32 = arith.constant 0 : i32
    %c0_i32_0 = arith.constant 0 : i32
    return %arg0, %c0_i32 : i32, i32
  }
}

</mosaic_0001>

<llo_original>
// kernel: tpu_custom_call.1
$region0: #{tpu_custom_call.1}
  #allocation0 [shape = 'u32[]', space=smem, size = 0x4, offset = 0x4, fixed_abs, tag = 'smem constant byte address 0x4 - core index']
  #allocation1 [shape = 'u32[144,128]{1,0:T(1,128)}', space=vmem, size = 0x12000, scoped, tag = 'internal scratch']
  %s0 = inlined_call_operand.vmem [shape: f32[8,4], index: 0, kind: input, shape index: {}]
  %s1 = inlined_call_operand.vmem [shape: f32[8,4], index: 1, kind: input, shape index: {}]
  %s2 = inlined_call_operand.vmem [shape: f32[8,4], index: 2, kind: output, shape index: {}]
  %s3 = sld [smem:[#allocation0]]
  $region22: #{tpu_custom_call.1} parent=0
    _
  %s5 = ssub.s32 1, %s3
  %s6 = scalar_select 0, %s5, %s3
  // Predicated region
  $region2: #{tpu_custom_call.1} parent=0 // pred_check
    _
  $region3: #{tpu_custom_call.1} parent=0 // pred_check_branch
    %8 = sbr.rel (0) target = $region5
  $region4: #{tpu_custom_call.1} parent=0 // pred_region
    %s9 = sadd.s32 0, 0
    %p10 = scmp.lt.s32.totalorder %s9, 0
    %s11 = scalar_select %p10, %s9, 0
    %s12 = smul.addr %s11, 8
    %s13 = scalar_lea.vmem %s0, %s12
    %s14 = sadd.s32 0, 0
  $region5: #{tpu_custom_call.1} parent=0 // pred_fallthru
    _
  // Predicated region
  $region6: #{tpu_custom_call.1} parent=0 // pred_check
    _
  $region7: #{tpu_custom_call.1} parent=0 // pred_check_branch
    %16 = sbr.rel (0) target = $region9
  $region8: #{tpu_custom_call.1} parent=0 // pred_region
    %s17 = sadd.s32 0, 0
    %p18 = scmp.lt.s32.totalorder %s17, 0
    %s19 = scalar_select %p18, %s17, 0
    %s20 = smul.addr %s19, 8
    %s21 = scalar_lea.vmem %s1, %s20
    %s22 = sadd.s32 0, 0
  $region9: #{tpu_custom_call.1} parent=0 // pred_fallthru
    _
  %s23 = sadd.s32 0, 0
  %p24 = scmp.lt.s32.totalorder %s23, 0
  %s25 = scalar_select %p24, %s23, 0
  %s26 = smul.addr %s25, 8
  %s27 = scalar_lea.vmem %s0, %s26
  %s28 = sadd.s32 0, 0
  %p29 = scmp.lt.s32.totalorder %s28, 0
  %s30 = scalar_select %p29, %s28, 0
  %s31 = smul.addr %s30, 8
  %s32 = scalar_lea.vmem %s1, %s31
  %s33 = sadd.s32 0, 0
  %p34 = scmp.lt.s32.totalorder %s33, 0
  %s35 = scalar_select %p34, %s33, 0
  %s36 = smul.addr %s35, 8
  %s37 = scalar_lea.vmem %s0, %s36
  %s38 = sadd.s32 0, 0
  %s39 = sadd.s32 0, 0
  %p40 = scmp.lt.s32.totalorder %s39, 0
  %s41 = scalar_select %p40, %s39, 0
  %s42 = smul.addr %s41, 8
  %s43 = scalar_lea.vmem %s1, %s42
  %s44 = sadd.s32 0, 0
  %p45 = scmp.eq.s32.totalorder 0, 0
  // Predicated region
  $region10: #{tpu_custom_call.1} parent=0 // pred_check
    %p46 = pneg %p45
  $region11: #{tpu_custom_call.1} parent=0 // pred_check_branch
    %48 = sbr.rel (%p46) target = $region13
  $region12: #{tpu_custom_call.1} parent=0 // pred_region
    %vm49 = vcmask 31744
    %50 = vst.msk [vmem:[%s2] sm:$0xff] %vm49, 0.0
  $region13: #{tpu_custom_call.1} parent=0 // pred_fallthru
    _
  %v51 = vld [vmem:[%s37] sm:$0xff]
  %v52 = vld [vmem:[%s43] sm:$0xff]
  %v53 = vlog2.pop %v51
  %v54 = vmul.f32 %v53, 0.6931472
  %v55 = vmax.f32 %v54, -100.0
  %v56 = vsub.f32 0.0, %v51
  %v57 = vadd.f32 %v56, 1.0
  %v58 = vlog2.pop %v57
  %v59 = vmul.f32 %v58, 0.6931472
  %v60 = vmul.f32 -0.5, %v56
  %v61 = vadd.f32 %v60, 1.0
  %v62 = vmul.f32 %v61, %v56
  %v63 = vand.u32 2147483647, %v56
  %vm64 = vcmp.lt.f32.partialorder %v63, 0.0004427343
  %v65 = vsel %vm64, %v62, %v59
  %v66 = vmax.f32 %v65, -100.0
  %v67 = vsub.f32 %v55, %v66
  %v68 = vmul.f32 %v52, %v67
  %v69 = vadd.f32 %v66, %v68
  %v70 = vld [vmem:[%s2] sm:$0xff]
  %v71 = vadd.f32 %v70, %v69
  %vm72 = vcmask 31744
  %73 = vst.msk [vmem:[%s2] sm:$0xff] %vm72, %v71
  // Predicated region
  $region14: #{tpu_custom_call.1} parent=0 // pred_check
    _
  $region15: #{tpu_custom_call.1} parent=0 // pred_check_branch
    %75 = sbr.rel (0) target = $region17
  $region16: #{tpu_custom_call.1} parent=0 // pred_region
    _
  $region17: #{tpu_custom_call.1} parent=0 // pred_fallthru
    _
  // Predicated region
  $region18: #{tpu_custom_call.1} parent=0 // pred_check
    _
  $region19: #{tpu_custom_call.1} parent=0 // pred_check_branch
    %77 = sbr.rel (0) target = $region21
  $region20: #{tpu_custom_call.1} parent=0 // pred_region
    _
  $region21: #{tpu_custom_call.1} parent=0 // pred_fallthru
    _

</llo_original>
